<compile_context>
chip_gen: v5e
topology: v5e:2x2
jax: 0.10.0
libtpu: 0.0.40
codegen_flags: <defaults>
</compile_context>

<pallas_src>
import functools

import jax
import jax.numpy as jnp
from jax.experimental import pallas as pl
from jax.experimental.pallas import tpu as pltpu


def _round_up(x, m):
    return ((x + m - 1) // m) * m


def _vmem_hint(block_bytes, *, headroom=4 << 20, cap=48 << 20):
    # Explicit scoped-VMEM budget: double-buffered blocks + margin, kept well
    # below v7x's 64 MiB physical VMEM per TensorCore.
    return int(min(cap, 2 * block_bytes + headroom))


# ----------------------------------------------------------------------------
# Kernel A: encoder body = conv(3x3, pad=1) as a batched matmul over im2col
#           patches, ReLU, global average pool -> per-image feature vector.
#           Processes TILE_N images per grid step; features padded to 128 lanes.
# ----------------------------------------------------------------------------
def _make_encoder_kernel(tile_n, hw):
    def kernel(p_ref, w_ref, b_ref, o_ref):
        # p_ref: (tile_n*hw, KKC) bf16   w_ref: (KKC, F_PAD) bf16
        # b_ref: (1, F_PAD) f32          o_ref: (tile_n, F_PAD) f32
        y = jnp.dot(p_ref[...], w_ref[...],
                    preferred_element_type=jnp.float32) + b_ref[...]
        y = jnp.maximum(y, 0.0)                              # ReLU (f32, VPU)
        for i in range(tile_n):                              # static unroll
            # adaptive avg pool (1x1) per image -> lane-dense (1, F_PAD) row
            o_ref[pl.ds(i, 1), :] = jnp.mean(y[i * hw:(i + 1) * hw, :],
                                             axis=0, keepdims=True)
    return kernel


def encoder_forward(patches2d, w, b, *, n_images, hw, tile_n=None):
    NHW, KKC = patches2d.shape
    F_PAD = w.shape[1]
    if tile_n is None:
        tile_n = n_images if n_images <= 8 else 8            # divisor of N
    assert n_images % tile_n == 0 and NHW == n_images * hw
    block_bytes = (tile_n * hw * KKC * 2 + KKC * F_PAD * 2
                   + F_PAD * 4 + tile_n * F_PAD * 4)
    return pl.pallas_call(
        _make_encoder_kernel(tile_n, hw),
        out_shape=jax.ShapeDtypeStruct((n_images, F_PAD), jnp.float32),
        grid=(n_images // tile_n,),
        in_specs=[
            pl.BlockSpec((tile_n * hw, KKC), lambda n: (n, 0)),
            pl.BlockSpec((KKC, F_PAD), lambda n: (0, 0)),
            pl.BlockSpec((1, F_PAD), lambda n: (0, 0)),
        ],
        out_specs=pl.BlockSpec((tile_n, F_PAD), lambda n: (n, 0)),
        compiler_params=pltpu.CompilerParams(
            dimension_semantics=("parallel",),
            vmem_limit_bytes=_vmem_hint(block_bytes),
        ),
    )(patches2d, w, b)


# ----------------------------------------------------------------------------
# Kernel B: both projection MLPs + L2 normalize in one kernel.
#   q = normalize(MLP_q(feat_q)); k = normalize(MLP_k(feat_k))
# ----------------------------------------------------------------------------
def _project_kernel(fq_ref, fk_ref,
                    w1q_ref, b1q_ref, w2q_ref, b2q_ref,
                    w1k_ref, b1k_ref, w2k_ref, b2k_ref,
                    q_ref, k_ref):
    def mlp(f, w1, b1, w2, b2):
        h = jnp.dot(f.astype(jnp.bfloat16), w1[...],
                    preferred_element_type=jnp.float32) + b1[...]
        h = jnp.maximum(h, 0.0)
        return jnp.dot(h.astype(jnp.bfloat16), w2[...],
                       preferred_element_type=jnp.float32) + b2[...]

    def l2norm(x):  # matches F.normalize(x, dim=1) (norm clamped at 1e-12)
        ss = jnp.sum(x * x, axis=1, keepdims=True)
        return x * jax.lax.rsqrt(jnp.maximum(ss, 1e-24))

    q_ref[...] = l2norm(mlp(fq_ref[...], w1q_ref, b1q_ref, w2q_ref, b2q_ref))
    k_ref[...] = l2norm(mlp(fk_ref[...], w1k_ref, b1k_ref, w2k_ref, b2k_ref))


def project_forward(fq, fk, w1q, b1q, w2q, b2q, w1k, b1k, w2k, b2k):
    N = fq.shape[0]
    DIM = w2q.shape[1]
    args = (fq, fk, w1q, b1q, w2q, b2q, w1k, b1k, w2k, b2k)
    in_specs = [pl.BlockSpec(a.shape, lambda i: (0, 0)) for a in args]
    block_bytes = sum(int(a.size) * a.dtype.itemsize for a in args) + 2 * N * DIM * 4
    return pl.pallas_call(
        _project_kernel,
        out_shape=(jax.ShapeDtypeStruct((N, DIM), jnp.float32),
                   jax.ShapeDtypeStruct((N, DIM), jnp.float32)),
        grid=(1,),
        in_specs=in_specs,
        out_specs=(pl.BlockSpec((N, DIM), lambda i: (0, 0)),
                   pl.BlockSpec((N, DIM), lambda i: (0, 0))),
        compiler_params=pltpu.CompilerParams(
            dimension_semantics=("arbitrary",),
            vmem_limit_bytes=_vmem_hint(block_bytes),
        ),
    )(*args)


# ----------------------------------------------------------------------------
# Kernel C: fused contrastive logits, tiled over the queue dimension.
#   column 0 of the output slab = l_pos = sum(q*k)/T
#   columns 1..K              = l_neg = (q @ queue)/T
# The queue is pre-shifted by one dummy column so every queue tile is a
# block-aligned (DIM, TILE_K) slice and the output slab is lane-dense.
# ----------------------------------------------------------------------------
def _make_logits_kernel(inv_T):
    def kernel(q_ref, k_ref, queue_ref, out_ref):
        # q_ref, k_ref: (N, DIM) f32 ; queue_ref: (DIM, TILE_K) bf16 tile j
        # out_ref: (N, TILE_K) f32 tile j of the fused logits slab.
        q = q_ref[...]
        lneg = jnp.dot(q.astype(jnp.bfloat16), queue_ref[...],
                       preferred_element_type=jnp.float32) * inv_T
        j = pl.program_id(0)

        @pl.when(j == 0)
        def _():
            lpos = jnp.sum(q * k_ref[...], axis=1, keepdims=True) * inv_T
            col = jax.lax.broadcasted_iota(jnp.int32, lneg.shape, 1)
            out_ref[...] = jnp.where(col == 0, lpos, lneg)

        @pl.when(j != 0)
        def _():
            out_ref[...] = lneg

    return kernel


def logits_forward(q, k, queue_shifted, *, T, tile_k):
    N, DIM = q.shape
    LPAD = queue_shifted.shape[1]
    assert LPAD % tile_k == 0
    block_bytes = 2 * N * DIM * 4 + DIM * tile_k * 2 + N * tile_k * 4
    return pl.pallas_call(
        _make_logits_kernel(1.0 / T),
        out_shape=jax.ShapeDtypeStruct((N, LPAD), jnp.float32),
        grid=(LPAD // tile_k,),
        in_specs=[
            pl.BlockSpec((N, DIM), lambda j: (0, 0)),
            pl.BlockSpec((N, DIM), lambda j: (0, 0)),
            pl.BlockSpec((DIM, tile_k), lambda j: (0, j)),
        ],
        out_specs=pl.BlockSpec((N, tile_k), lambda j: (0, j)),
        compiler_params=pltpu.CompilerParams(
            dimension_semantics=("parallel",),       # shards K tiles across TCs
            vmem_limit_bytes=_vmem_hint(block_bytes),
        ),
    )(q, k, queue_shifted)


# ----------------------------------------------------------------------------
# Glue: im2col, momentum update, queue maintenance.
# ----------------------------------------------------------------------------
def im2col(x_nchw, kh=3, kw=3):
    # TODO(synk): for realistic H,W,Cin do the 3x3 patch extraction on-chip
    # (shifted loads inside the encoder kernel) instead of materializing the
    # 9x-larger patch buffer in HBM.
    x = jnp.transpose(x_nchw, (0, 2, 3, 1))              # NCHW -> NHWC
    N, H, W, C = x.shape
    xp = jnp.pad(x, ((0, 0), (1, 1), (1, 1), (0, 0)))
    taps = [xp[:, dy:dy + H, dx:dx + W, :] for dy in range(kh) for dx in range(kw)]
    p = jnp.stack(taps, axis=3)                          # (N, H, W, kh*kw, C)
    return p.reshape(N, H * W, kh * kw * C)


@functools.partial(jax.jit, static_argnames=("m", "T"))
def moco_forward(im_q, im_k, params, queue, queue_ptr, *, m=0.999, T=0.07):
    (wc_q, bc_q, wc_k, bc_k,
     w1q, b1q, w2q, b2q,
     w1k, b1k, w2k, b2k) = params

    # momentum update of the KEY ENCODER parameters (the projection heads are
    # separate modules in the reference and are not momentum-updated).
    wc_k = m * wc_k + (1.0 - m) * wc_q
    bc_k = m * bc_k + (1.0 - m) * bc_q

    N, _, H, W = im_q.shape
    HW = H * W
    F = wc_q.shape[-1]
    DIM, Kq = queue.shape
    F_PAD = _round_up(F, 128)           # lane-dense feature slab

    # im2col patches, flattened to a 2-D matmul operand, bf16 for the MXU.
    pq = im2col(im_q).reshape(N * HW, -1).astype(jnp.bfloat16)
    pk = im2col(im_k).reshape(N * HW, -1).astype(jnp.bfloat16)
    KKC = pq.shape[-1]

    def conv_params(wc, bc):
        w = jnp.pad(wc.reshape(KKC, F), ((0, 0), (0, F_PAD - F))).astype(jnp.bfloat16)
        b = jnp.pad(bc.reshape(1, F), ((0, 0), (0, F_PAD - F)))       # f32
        return w, b

    wq_mat, bq_row = conv_params(wc_q, bc_q)
    wk_mat, bk_row = conv_params(wc_k, bc_k)

    fq = encoder_forward(pq, wq_mat, bq_row, n_images=N, hw=HW)   # (N, F_PAD) f32
    fk = encoder_forward(pk, wk_mat, bk_row, n_images=N, hw=HW)

    def head_params(w1, b1, w2, b2):
        # zero-pad w1's input dim to match the padded feature slab (exact math)
        w1p = jnp.pad(w1, ((0, F_PAD - F), (0, 0))).astype(jnp.bfloat16)
        return w1p, b1.reshape(1, -1), w2.astype(jnp.bfloat16), b2.reshape(1, -1)

    q, k = project_forward(fq, fk,
                           *head_params(w1q, b1q, w2q, b2q),
                           *head_params(w1k, b1k, w2k, b2k))      # (N, DIM) f32

    # fused lane-dense logits slab; column 0 reserved for l_pos.
    TILE_K = min(1024, _round_up(1 + Kq, 128))
    LPAD = _round_up(1 + Kq, TILE_K)
    queue_shifted = jnp.pad(queue, ((0, 0), (1, LPAD - 1 - Kq))).astype(jnp.bfloat16)
    logits_pad = logits_forward(q, k, queue_shifted, T=T, tile_k=TILE_K)  # (N, LPAD)
    logits = logits_pad[:, :1 + Kq]                   # already scaled by 1/T
    labels = jnp.zeros((N,), jnp.int32)               # torch.long -> int32

    # _dequeue_and_enqueue: scatter only the N updated columns (wraparound-safe).
    # (In a training loop, donate the queue buffer to jit so this is in-place.)
    ptr = queue_ptr[0]
    cols = (ptr + jnp.arange(N, dtype=queue_ptr.dtype)) % Kq
    new_queue = queue.at[:, cols].set(k.T)
    new_ptr = (queue_ptr + N) % Kq

    return (logits, labels), new_queue, new_ptr


# ----------------------------------------------------------------------------
if __name__ == "__main__":
    key = jax.random.PRNGKey(0)
    N, Cin, H, W = 2, 3, 16, 16     # small synthetic images (NCHW like PyTorch)
    F = 32                          # encoder in_features
    DIM = 16                        # projection dim
    K = 64                          # queue size
    T = 0.07
    M_MOM = 0.999

    ks = jax.random.split(key, 13)
    im_q = jax.random.normal(ks[0], (N, Cin, H, W), jnp.float32)
    im_k = jax.random.normal(ks[1], (N, Cin, H, W), jnp.float32)

    # base encoder: Conv2d(Cin, F, 3, pad=1) -> ReLU -> AdaptiveAvgPool2d(1); fc stripped.
    # TODO(synk): the reference uses an arbitrary pretrained base_encoder (e.g. ResNet);
    # a single conv block with deterministic random weights stands in for it.
    wc_q = jax.random.normal(ks[2], (3, 3, Cin, F), jnp.float32) * 0.1
    bc_q = jax.random.normal(ks[3], (F,), jnp.float32) * 0.1
    wc_k, bc_k = wc_q, bc_q                               # param_k.copy_(param_q)

    # projection heads (independent inits, as in the reference)
    w1q = jax.random.normal(ks[4], (F, F), jnp.float32) * 0.1
    b1q = jax.random.normal(ks[5], (F,), jnp.float32) * 0.1
    w2q = jax.random.normal(ks[6], (F, DIM), jnp.float32) * 0.1
    b2q = jax.random.normal(ks[7], (DIM,), jnp.float32) * 0.1
    w1k = jax.random.normal(ks[8], (F, F), jnp.float32) * 0.1
    b1k = jax.random.normal(ks[9], (F,), jnp.float32) * 0.1
    w2k = jax.random.normal(ks[10], (F, DIM), jnp.float32) * 0.1
    b2k = jax.random.normal(ks[11], (DIM,), jnp.float32) * 0.1

    # queue buffer: randn(dim, K) normalized along dim=0
    queue = jax.random.normal(ks[12], (DIM, K), jnp.float32)
    queue = queue / jnp.maximum(jnp.linalg.norm(queue, axis=0, keepdims=True), 1e-12)
    queue_ptr = jnp.zeros((1,), jnp.int32)

    params = (wc_q, bc_q, wc_k, bc_k, w1q, b1q, w2q, b2q, w1k, b1k, w2k, b2k)

    (logits, labels), new_queue, new_ptr = moco_forward(
        im_q, im_k, params, queue, queue_ptr, m=M_MOM, T=T)

    jax.block_until_ready((logits, labels, new_queue, new_ptr))
    assert logits.shape == (N, 1 + K) and labels.shape == (N,)
    assert new_queue.shape == (DIM, K) and int(new_ptr[0]) == (N % K)
    print("KERNEL_OK")
</pallas_src>

<mosaic_0001>
module attributes {stable_mosaic.version = 11 : i64} {
  func.func @kernel(%arg0: i32, %arg1: memref<512x27xbf16, #tpu.memory_space<vmem>>, %arg2: memref<27x128xbf16, #tpu.memory_space<vmem>>, %arg3: memref<1x128xf32, #tpu.memory_space<vmem>>, %arg4: memref<2x128xf32, #tpu.memory_space<vmem>>) attributes {dimension_semantics = [#tpu.dimension_semantics<parallel>], iteration_bounds = array<i64: 1>, scalar_prefetch = 0 : i64, scratch_operands = 0 : i64, tpu.core_type = #tpu.core_type<tc>, window_params = [{transform_indices = @transform_0, window_bounds = array<i64: 512, 27>}, {pipeline_mode = #tpu.pipeline_mode<synchronous>, transform_indices = @transform_1, window_bounds = array<i64: 27, 128>}, {pipeline_mode = #tpu.pipeline_mode<synchronous>, transform_indices = @transform_2, window_bounds = array<i64: 1, 128>}, {transform_indices = @transform_3, window_bounds = array<i64: 2, 128>}]} {
    %c0 = arith.constant 0 : index
    %c0_0 = arith.constant 0 : index
    %0 = vector.load %arg1[%c0, %c0_0] : memref<512x27xbf16, #tpu.memory_space<vmem>>, vector<512x27xbf16>
    %c0_1 = arith.constant 0 : index
    %c0_2 = arith.constant 0 : index
    %1 = vector.load %arg2[%c0_1, %c0_2] : memref<27x128xbf16, #tpu.memory_space<vmem>>, vector<27x128xbf16>
    %cst = arith.constant dense<0.000000e+00> : vector<512x128xf32>
    %2 = tpu.matmul %0, %1, %cst {dimension_numbers = #tpu.dot_dimension_numbers<[1], [0], [0], [1], [0, 0, 1, 1], [], []>} : vector<512x27xbf16>, vector<27x128xbf16>, vector<512x128xf32> -> vector<512x128xf32>
    %c0_3 = arith.constant 0 : index
    %c0_4 = arith.constant 0 : index
    %3 = vector.load %arg3[%c0_3, %c0_4] : memref<1x128xf32, #tpu.memory_space<vmem>>, vector<1x128xf32>
    %4 = vector.broadcast %3 : vector<1x128xf32> to vector<512x128xf32>
    %5 = arith.addf %2, %4 : vector<512x128xf32>
    %cst_5 = arith.constant 0.000000e+00 : f32
    %6 = vector.broadcast %cst_5 : f32 to vector<512x128xf32>
    %7 = arith.maximumf %5, %6 : vector<512x128xf32>
    %8 = vector.extract_strided_slice %7 {offsets = [0, 0], sizes = [256, 128], strides = [1, 1]} : vector<512x128xf32> to vector<256x128xf32>
    %cst_6 = arith.constant dense<0.000000e+00> : vector<128xf32>
    %9 = vector.multi_reduction <add>, %8, %cst_6 [0] : vector<256x128xf32> to vector<128xf32>
    %10 = vector.shape_cast %9 : vector<128xf32> to vector<1x128xf32>
    %cst_7 = arith.constant 2.560000e+02 : f32
    %11 = vector.broadcast %cst_7 : f32 to vector<1x128xf32>
    %12 = arith.divf %10, %11 : vector<1x128xf32>
    %c0_8 = arith.constant 0 : index
    %c0_9 = arith.constant 0 : index
    %13 = vector.load %arg4[%c0_8, %c0_9] : memref<2x128xf32, #tpu.memory_space<vmem>>, vector<1x128xf32>
    tpu.vector_store %arg4[%c0_8, %c0_9], %12 {strides = array<i32>} : memref<2x128xf32, #tpu.memory_space<vmem>>, vector<1x128xf32>,
    %14 = vector.extract_strided_slice %7 {offsets = [256, 0], sizes = [256, 128], strides = [1, 1]} : vector<512x128xf32> to vector<256x128xf32>
    %cst_10 = arith.constant dense<0.000000e+00> : vector<128xf32>
    %15 = vector.multi_reduction <add>, %14, %cst_10 [0] : vector<256x128xf32> to vector<128xf32>
    %16 = vector.shape_cast %15 : vector<128xf32> to vector<1x128xf32>
    %cst_11 = arith.constant 2.560000e+02 : f32
    %17 = vector.broadcast %cst_11 : f32 to vector<1x128xf32>
    %18 = arith.divf %16, %17 : vector<1x128xf32>
    %c1 = arith.constant 1 : index
    %c0_12 = arith.constant 0 : index
    %19 = vector.load %arg4[%c1, %c0_12] : memref<2x128xf32, #tpu.memory_space<vmem>>, vector<1x128xf32>
    tpu.vector_store %arg4[%c1, %c0_12], %18 {strides = array<i32>} : memref<2x128xf32, #tpu.memory_space<vmem>>, vector<1x128xf32>,
    return
  }
  func.func @transform_0(%arg0: i32) -> (i32, i32) {
    %c0_i32 = arith.constant 0 : i32
    %c0_i32_0 = arith.constant 0 : i32
    return %arg0, %c0_i32 : i32, i32
  }
  func.func @transform_1(%arg0: i32) -> (i32, i32) {
    %c0_i32 = arith.constant 0 : i32
    %c0_i32_0 = arith.constant 0 : i32
    %c0_i32_1 = arith.constant 0 : i32
    return %c0_i32, %c0_i32_0 : i32, i32
  }
  func.func @transform_2(%arg0: i32) -> (i32, i32) {
    %c0_i32 = arith.constant 0 : i32
    %c0_i32_0 = arith.constant 0 : i32
    %c0_i32_1 = arith.constant 0 : i32
    return %c0_i32, %c0_i32_0 : i32, i32
  }
  func.func @transform_3(%arg0: i32) -> (i32, i32) {
    %c0_i32 = arith.constant 0 : i32
    %c0_i32_0 = arith.constant 0 : i32
    return %arg0, %c0_i32 : i32, i32
  }
}

module attributes {stable_mosaic.version = 11 : i64} {
  func.func @_project_kernel(%arg0: i32, %arg1: memref<2x128xf32, #tpu.memory_space<vmem>>, %arg2: memref<2x128xf32, #tpu.memory_space<vmem>>, %arg3: memref<128x32xbf16, #tpu.memory_space<vmem>>, %arg4: memref<1x32xf32, #tpu.memory_space<vmem>>, %arg5: memref<32x16xbf16, #tpu.memory_space<vmem>>, %arg6: memref<1x16xf32, #tpu.memory_space<vmem>>, %arg7: memref<128x32xbf16, #tpu.memory_space<vmem>>, %arg8: memref<1x32xf32, #tpu.memory_space<vmem>>, %arg9: memref<32x16xbf16, #tpu.memory_space<vmem>>, %arg10: memref<1x16xf32, #tpu.memory_space<vmem>>, %arg11: memref<2x16xf32, #tpu.memory_space<vmem>>, %arg12: memref<2x16xf32, #tpu.memory_space<vmem>>) attributes {dimension_semantics = [#tpu.dimension_semantics<arbitrary>], iteration_bounds = array<i64: 1>, scalar_prefetch = 0 : i64, scratch_operands = 0 : i64, tpu.core_type = #tpu.core_type<tc>, window_params = [{pipeline_mode = #tpu.pipeline_mode<synchronous>, transform_indices = @transform_0, window_bounds = array<i64: 2, 128>}, {pipeline_mode = #tpu.pipeline_mode<synchronous>, transform_indices = @transform_1, window_bounds = array<i64: 2, 128>}, {pipeline_mode = #tpu.pipeline_mode<synchronous>, transform_indices = @transform_2, window_bounds = array<i64: 128, 32>}, {pipeline_mode = #tpu.pipeline_mode<synchronous>, transform_indices = @transform_3, window_bounds = array<i64: 1, 32>}, {pipeline_mode = #tpu.pipeline_mode<synchronous>, transform_indices = @transform_4, window_bounds = array<i64: 32, 16>}, {pipeline_mode = #tpu.pipeline_mode<synchronous>, transform_indices = @transform_5, window_bounds = array<i64: 1, 16>}, {pipeline_mode = #tpu.pipeline_mode<synchronous>, transform_indices = @transform_6, window_bounds = array<i64: 128, 32>}, {pipeline_mode = #tpu.pipeline_mode<synchronous>, transform_indices = @transform_7, window_bounds = array<i64: 1, 32>}, {pipeline_mode = #tpu.pipeline_mode<synchronous>, transform_indices = @transform_8, window_bounds = array<i64: 32, 16>}, {pipeline_mode = #tpu.pipeline_mode<synchronous>, transform_indices = @transform_9, window_bounds = array<i64: 1, 16>}, {pipeline_mode = #tpu.pipeline_mode<synchronous>, transform_indices = @transform_10, window_bounds = array<i64: 2, 16>}, {pipeline_mode = #tpu.pipeline_mode<synchronous>, transform_indices = @transform_11, window_bounds = array<i64: 2, 16>}]} {
    %c0 = arith.constant 0 : index
    %c0_0 = arith.constant 0 : index
    %0 = vector.load %arg1[%c0, %c0_0] : memref<2x128xf32, #tpu.memory_space<vmem>>, vector<2x128xf32>
    %1 = arith.truncf %0 : vector<2x128xf32> to vector<2x128xbf16>
    %c0_1 = arith.constant 0 : index
    %c0_2 = arith.constant 0 : index
    %2 = vector.load %arg3[%c0_1, %c0_2] : memref<128x32xbf16, #tpu.memory_space<vmem>>, vector<128x32xbf16>
    %cst = arith.constant dense<0.000000e+00> : vector<2x32xf32>
    %3 = tpu.matmul %1, %2, %cst {dimension_numbers = #tpu.dot_dimension_numbers<[1], [0], [0], [1], [0, 0, 1, 1], [], []>} : vector<2x128xbf16>, vector<128x32xbf16>, vector<2x32xf32> -> vector<2x32xf32>
    %c0_3 = arith.constant 0 : index
    %c0_4 = arith.constant 0 : index
    %4 = vector.load %arg4[%c0_3, %c0_4] : memref<1x32xf32, #tpu.memory_space<vmem>>, vector<1x32xf32>
    %5 = vector.broadcast %4 : vector<1x32xf32> to vector<2x32xf32>
    %6 = arith.addf %3, %5 : vector<2x32xf32>
    %cst_5 = arith.constant 0.000000e+00 : f32
    %7 = vector.broadcast %cst_5 : f32 to vector<2x32xf32>
    %8 = arith.maximumf %6, %7 : vector<2x32xf32>
    %9 = arith.truncf %8 : vector<2x32xf32> to vector<2x32xbf16>
    %c0_6 = arith.constant 0 : index
    %c0_7 = arith.constant 0 : index
    %10 = vector.load %arg5[%c0_6, %c0_7] : memref<32x16xbf16, #tpu.memory_space<vmem>>, vector<32x16xbf16>
    %cst_8 = arith.constant dense<0.000000e+00> : vector<2x16xf32>
    %11 = tpu.matmul %9, %10, %cst_8 {dimension_numbers = #tpu.dot_dimension_numbers<[1], [0], [0], [1], [0, 0, 1, 1], [], []>} : vector<2x32xbf16>, vector<32x16xbf16>, vector<2x16xf32> -> vector<2x16xf32>
    %c0_9 = arith.constant 0 : index
    %c0_10 = arith.constant 0 : index
    %12 = vector.load %arg6[%c0_9, %c0_10] : memref<1x16xf32, #tpu.memory_space<vmem>>, vector<1x16xf32>
    %13 = vector.broadcast %12 : vector<1x16xf32> to vector<2x16xf32>
    %14 = arith.addf %11, %13 : vector<2x16xf32>
    %15 = arith.mulf %14, %14 : vector<2x16xf32>
    %cst_11 = arith.constant dense<0.000000e+00> : vector<2xf32>
    %16 = vector.multi_reduction <add>, %15, %cst_11 [1] : vector<2x16xf32> to vector<2xf32>
    %17 = vector.shape_cast %16 : vector<2xf32> to vector<2x1xf32>
    %cst_12 = arith.constant 1.000000e-24 : f32
    %18 = vector.broadcast %cst_12 : f32 to vector<2x1xf32>
    %19 = arith.maximumf %17, %18 : vector<2x1xf32>
    %20 = math.rsqrt %19 : vector<2x1xf32>
    %21 = vector.broadcast %20 : vector<2x1xf32> to vector<2x16xf32>
    %22 = arith.mulf %14, %21 : vector<2x16xf32>
    %c0_13 = arith.constant 0 : index
    %c0_14 = arith.constant 0 : index
    %23 = vector.load %arg11[%c0_13, %c0_14] : memref<2x16xf32, #tpu.memory_space<vmem>>, vector<2x16xf32>
    tpu.vector_store %arg11[%c0_13, %c0_14], %22 {strides = array<i32>} : memref<2x16xf32, #tpu.memory_space<vmem>>, vector<2x16xf32>,
    %c0_15 = arith.constant 0 : index
    %c0_16 = arith.constant 0 : index
    %24 = vector.load %arg2[%c0_15, %c0_16] : memref<2x128xf32, #tpu.memory_space<vmem>>, vector<2x128xf32>
    %25 = arith.truncf %24 : vector<2x128xf32> to vector<2x128xbf16>
    %c0_17 = arith.constant 0 : index
    %c0_18 = arith.constant 0 : index
    %26 = vector.load %arg7[%c0_17, %c0_18] : memref<128x32xbf16, #tpu.memory_space<vmem>>, vector<128x32xbf16>
    %cst_19 = arith.constant dense<0.000000e+00> : vector<2x32xf32>
    %27 = tpu.matmul %25, %26, %cst_19 {dimension_numbers = #tpu.dot_dimension_numbers<[1], [0], [0], [1], [0, 0, 1, 1], [], []>} : vector<2x128xbf16>, vector<128x32xbf16>, vector<2x32xf32> -> vector<2x32xf32>
    %c0_20 = arith.constant 0 : index
    %c0_21 = arith.constant 0 : index
    %28 = vector.load %arg8[%c0_20, %c0_21] : memref<1x32xf32, #tpu.memory_space<vmem>>, vector<1x32xf32>
    %29 = vector.broadcast %28 : vector<1x32xf32> to vector<2x32xf32>
    %30 = arith.addf %27, %29 : vector<2x32xf32>
    %cst_22 = arith.constant 0.000000e+00 : f32
    %31 = vector.broadcast %cst_22 : f32 to vector<2x32xf32>
    %32 = arith.maximumf %30, %31 : vector<2x32xf32>
    %33 = arith.truncf %32 : vector<2x32xf32> to vector<2x32xbf16>
    %c0_23 = arith.constant 0 : index
    %c0_24 = arith.constant 0 : index
    %34 = vector.load %arg9[%c0_23, %c0_24] : memref<32x16xbf16, #tpu.memory_space<vmem>>, vector<32x16xbf16>
    %cst_25 = arith.constant dense<0.000000e+00> : vector<2x16xf32>
    %35 = tpu.matmul %33, %34, %cst_25 {dimension_numbers = #tpu.dot_dimension_numbers<[1], [0], [0], [1], [0, 0, 1, 1], [], []>} : vector<2x32xbf16>, vector<32x16xbf16>, vector<2x16xf32> -> vector<2x16xf32>
    %c0_26 = arith.constant 0 : index
    %c0_27 = arith.constant 0 : index
    %36 = vector.load %arg10[%c0_26, %c0_27] : memref<1x16xf32, #tpu.memory_space<vmem>>, vector<1x16xf32>
    %37 = vector.broadcast %36 : vector<1x16xf32> to vector<2x16xf32>
    %38 = arith.addf %35, %37 : vector<2x16xf32>
    %39 = arith.mulf %38, %38 : vector<2x16xf32>
    %cst_28 = arith.constant dense<0.000000e+00> : vector<2xf32>
    %40 = vector.multi_reduction <add>, %39, %cst_28 [1] : vector<2x16xf32> to vector<2xf32>
    %41 = vector.shape_cast %40 : vector<2xf32> to vector<2x1xf32>
    %cst_29 = arith.constant 1.000000e-24 : f32
    %42 = vector.broadcast %cst_29 : f32 to vector<2x1xf32>
    %43 = arith.maximumf %41, %42 : vector<2x1xf32>
    %44 = math.rsqrt %43 : vector<2x1xf32>
    %45 = vector.broadcast %44 : vector<2x1xf32> to vector<2x16xf32>
    %46 = arith.mulf %38, %45 : vector<2x16xf32>
    %c0_30 = arith.constant 0 : index
    %c0_31 = arith.constant 0 : index
    %47 = vector.load %arg12[%c0_30, %c0_31] : memref<2x16xf32, #tpu.memory_space<vmem>>, vector<2x16xf32>
    tpu.vector_store %arg12[%c0_30, %c0_31], %46 {strides = array<i32>} : memref<2x16xf32, #tpu.memory_space<vmem>>, vector<2x16xf32>,
    return
  }
  func.func @transform_0(%arg0: i32) -> (i32, i32) {
    %c0_i32 = arith.constant 0 : i32
    %c0_i32_0 = arith.constant 0 : i32
    %c0_i32_1 = arith.constant 0 : i32
    return %c0_i32, %c0_i32_0 : i32, i32
  }
  func.func @transform_1(%arg0: i32) -> (i32, i32) {
    %c0_i32 = arith.constant 0 : i32
    %c0_i32_0 = arith.constant 0 : i32
    %c0_i32_1 = arith.constant 0 : i32
    return %c0_i32, %c0_i32_0 : i32, i32
  }
  func.func @transform_2(%arg0: i32) -> (i32, i32) {
    %c0_i32 = arith.constant 0 : i32
    %c0_i32_0 = arith.constant 0 : i32
    %c0_i32_1 = arith.constant 0 : i32
    return %c0_i32, %c0_i32_0 : i32, i32
  }
  func.func @transform_3(%arg0: i32) -> (i32, i32) {
    %c0_i32 = arith.constant 0 : i32
    %c0_i32_0 = arith.constant 0 : i32
    %c0_i32_1 = arith.constant 0 : i32
    return %c0_i32, %c0_i32_0 : i32, i32
  }
  func.func @transform_4(%arg0: i32) -> (i32, i32) {
    %c0_i32 = arith.constant 0 : i32
    %c0_i32_0 = arith.constant 0 : i32
    %c0_i32_1 = arith.constant 0 : i32
    return %c0_i32, %c0_i32_0 : i32, i32
  }
  func.func @transform_5(%arg0: i32) -> (i32, i32) {
    %c0_i32 = arith.constant 0 : i32
    %c0_i32_0 = arith.constant 0 : i32
    %c0_i32_1 = arith.constant 0 : i32
    return %c0_i32, %c0_i32_0 : i32, i32
  }
  func.func @transform_6(%arg0: i32) -> (i32, i32) {
    %c0_i32 = arith.constant 0 : i32
    %c0_i32_0 = arith.constant 0 : i32
    %c0_i32_1 = arith.constant 0 : i32
    return %c0_i32, %c0_i32_0 : i32, i32
  }
  func.func @transform_7(%arg0: i32) -> (i32, i32) {
    %c0_i32 = arith.constant 0 : i32
    %c0_i32_0 = arith.constant 0 : i32
    %c0_i32_1 = arith.constant 0 : i32
    return %c0_i32, %c0_i32_0 : i32, i32
  }
  func.func @transform_8(%arg0: i32) -> (i32, i32) {
    %c0_i32 = arith.constant 0 : i32
    %c0_i32_0 = arith.constant 0 : i32
    %c0_i32_1 = arith.constant 0 : i32
    return %c0_i32, %c0_i32_0 : i32, i32
  }
  func.func @transform_9(%arg0: i32) -> (i32, i32) {
    %c0_i32 = arith.constant 0 : i32
    %c0_i32_0 = arith.constant 0 : i32
    %c0_i32_1 = arith.constant 0 : i32
    return %c0_i32, %c0_i32_0 : i32, i32
  }
  func.func @transform_10(%arg0: i32) -> (i32, i32) {
    %c0_i32 = arith.constant 0 : i32
    %c0_i32_0 = arith.constant 0 : i32
    %c0_i32_1 = arith.constant 0 : i32
    return %c0_i32, %c0_i32_0 : i32, i32
  }
  func.func @transform_11(%arg0: i32) -> (i32, i32) {
    %c0_i32 = arith.constant 0 : i32
    %c0_i32_0 = arith.constant 0 : i32
    %c0_i32_1 = arith.constant 0 : i32
    return %c0_i32, %c0_i32_0 : i32, i32
  }
}

module attributes {stable_mosaic.version = 11 : i64} {
  func.func @kernel(%arg0: i32, %arg1: memref<2x16xf32, #tpu.memory_space<vmem>>, %arg2: memref<2x16xf32, #tpu.memory_space<vmem>>, %arg3: memref<16x128xbf16, #tpu.memory_space<vmem>>, %arg4: memref<2x128xf32, #tpu.memory_space<vmem>>) attributes {dimension_semantics = [#tpu.dimension_semantics<parallel>], iteration_bounds = array<i64: 1>, scalar_prefetch = 0 : i64, scratch_operands = 0 : i64, tpu.core_type = #tpu.core_type<tc>, window_params = [{pipeline_mode = #tpu.pipeline_mode<synchronous>, transform_indices = @transform_0, window_bounds = array<i64: 2, 16>}, {pipeline_mode = #tpu.pipeline_mode<synchronous>, transform_indices = @transform_1, window_bounds = array<i64: 2, 16>}, {transform_indices = @transform_2, window_bounds = array<i64: 16, 128>}, {transform_indices = @transform_3, window_bounds = array<i64: 2, 128>}]} {
    %c0 = arith.constant 0 : index
    %c0_0 = arith.constant 0 : index
    %0 = vector.load %arg1[%c0, %c0_0] : memref<2x16xf32, #tpu.memory_space<vmem>>, vector<2x16xf32>
    %1 = arith.truncf %0 : vector<2x16xf32> to vector<2x16xbf16>
    %c0_1 = arith.constant 0 : index
    %c0_2 = arith.constant 0 : index
    %2 = vector.load %arg3[%c0_1, %c0_2] : memref<16x128xbf16, #tpu.memory_space<vmem>>, vector<16x128xbf16>
    %cst = arith.constant dense<0.000000e+00> : vector<2x128xf32>
    %3 = tpu.matmul %1, %2, %cst {dimension_numbers = #tpu.dot_dimension_numbers<[1], [0], [0], [1], [0, 0, 1, 1], [], []>} : vector<2x16xbf16>, vector<16x128xbf16>, vector<2x128xf32> -> vector<2x128xf32>
    %cst_3 = arith.constant 14.2857141 : f32
    %4 = vector.broadcast %cst_3 : f32 to vector<2x128xf32>
    %5 = arith.mulf %3, %4 : vector<2x128xf32>
    %c0_i32 = arith.constant 0 : i32
    %6 = arith.cmpi eq, %arg0, %c0_i32 : i32
    %7 = arith.extui %6 : i1 to i32
    %c0_i32_4 = arith.constant 0 : i32
    %8 = arith.cmpi ne, %7, %c0_i32_4 : i32
    scf.if %8 {
      %c0_7 = arith.constant 0 : index
      %c0_8 = arith.constant 0 : index
      %12 = vector.load %arg2[%c0_7, %c0_8] : memref<2x16xf32, #tpu.memory_space<vmem>>, vector<2x16xf32>
      %13 = arith.mulf %0, %12 : vector<2x16xf32>
      %cst_9 = arith.constant dense<0.000000e+00> : vector<2xf32>
      %14 = vector.multi_reduction <add>, %13, %cst_9 [1] : vector<2x16xf32> to vector<2xf32>
      %15 = vector.shape_cast %14 : vector<2xf32> to vector<2x1xf32>
      %cst_10 = arith.constant 14.2857141 : f32
      %16 = vector.broadcast %cst_10 : f32 to vector<2x1xf32>
      %17 = arith.mulf %15, %16 : vector<2x1xf32>
      %18 = tpu.iota {dimensions = array<i32: 1>} : vector<2x128xi32>
      %c0_i32_11 = arith.constant 0 : i32
      %19 = vector.broadcast %c0_i32_11 : i32 to vector<2x128xi32>
      %20 = arith.cmpi eq, %18, %19 : vector<2x128xi32>
      %21 = vector.shape_cast %17 : vector<2x1xf32> to vector<2x1xf32>
      %22 = vector.broadcast %21 : vector<2x1xf32> to vector<2x128xf32>
      %23 = arith.select %20, %22, %5 : vector<2x128xi1>, vector<2x128xf32>
      %c0_12 = arith.constant 0 : index
      %c0_13 = arith.constant 0 : index
      %24 = vector.load %arg4[%c0_12, %c0_13] : memref<2x128xf32, #tpu.memory_space<vmem>>, vector<2x128xf32>
      tpu.vector_store %arg4[%c0_12, %c0_13], %23 {strides = array<i32>} : memref<2x128xf32, #tpu.memory_space<vmem>>, vector<2x128xf32>,
    } else {
    }
    %c0_i32_5 = arith.constant 0 : i32
    %9 = arith.cmpi ne, %arg0, %c0_i32_5 : i32
    %10 = arith.extui %9 : i1 to i32
    %c0_i32_6 = arith.constant 0 : i32
    %11 = arith.cmpi ne, %10, %c0_i32_6 : i32
    scf.if %11 {
      %c0_7 = arith.constant 0 : index
      %c0_8 = arith.constant 0 : index
      %12 = vector.load %arg4[%c0_7, %c0_8] : memref<2x128xf32, #tpu.memory_space<vmem>>, vector<2x128xf32>
      tpu.vector_store %arg4[%c0_7, %c0_8], %5 {strides = array<i32>} : memref<2x128xf32, #tpu.memory_space<vmem>>, vector<2x128xf32>,
    } else {
    }
    return
  }
  func.func @transform_0(%arg0: i32) -> (i32, i32) {
    %c0_i32 = arith.constant 0 : i32
    %c0_i32_0 = arith.constant 0 : i32
    %c0_i32_1 = arith.constant 0 : i32
    return %c0_i32, %c0_i32_0 : i32, i32
  }
  func.func @transform_1(%arg0: i32) -> (i32, i32) {
    %c0_i32 = arith.constant 0 : i32
    %c0_i32_0 = arith.constant 0 : i32
    %c0_i32_1 = arith.constant 0 : i32
    return %c0_i32, %c0_i32_0 : i32, i32
  }
  func.func @transform_2(%arg0: i32) -> (i32, i32) {
    %c0_i32 = arith.constant 0 : i32
    %c0_i32_0 = arith.constant 0 : i32
    return %c0_i32, %arg0 : i32, i32
  }
  func.func @transform_3(%arg0: i32) -> (i32, i32) {
    %c0_i32 = arith.constant 0 : i32
    %c0_i32_0 = arith.constant 0 : i32
    return %c0_i32, %arg0 : i32, i32
  }
}

</mosaic_0001>

<llo_original>
// kernel: moco_forward.6
$region0: #{moco_forward.6}
  #allocation0 [shape = 'u32[]', space=smem, size = 0x4, offset = 0x4, fixed_abs, tag = 'smem constant byte address 0x4 - core index']
  #allocation1 [shape = 'u32[72,128]{1,0:T(1,128)}', space=vmem, size = 0x9000, scoped, tag = 'internal scratch']
  %s0 = inlined_call_operand.vmem [shape: f32[2,128], index: 0, kind: input, shape index: {}]
  %s1 = inlined_call_operand.vmem [shape: f32[2,128], index: 1, kind: input, shape index: {}]
  %s2 = inlined_call_operand.vmem [shape: bf16[128,32], index: 2, kind: input, shape index: {}]
  %s3 = inlined_call_operand.vmem [shape: f32[1,32], index: 3, kind: input, shape index: {}]
  %s4 = inlined_call_operand.vmem [shape: bf16[32,16], index: 4, kind: input, shape index: {}]
  %s5 = inlined_call_operand.vmem [shape: f32[1,16], index: 5, kind: input, shape index: {}]
  %s6 = inlined_call_operand.vmem [shape: bf16[128,32], index: 6, kind: input, shape index: {}]
  %s7 = inlined_call_operand.vmem [shape: f32[1,32], index: 7, kind: input, shape index: {}]
  %s8 = inlined_call_operand.vmem [shape: bf16[32,16], index: 8, kind: input, shape index: {}]
  %s9 = inlined_call_operand.vmem [shape: f32[1,16], index: 9, kind: input, shape index: {}]
  %s10 = inlined_call_operand.vmem [shape: f32[2,16], index: 10, kind: output, shape index: {0}]
  %s11 = inlined_call_operand.vmem [shape: f32[2,16], index: 11, kind: output, shape index: {1}]
  %12 = xla_tuple %s10, %s11
  %s13 = sld [smem:[#allocation0]]
  $region58: #{moco_forward.6} parent=0
    _
  %s15 = ssub.s32 1, %s13
  %s16 = scalar_select 0, %s15, %s13
  // Predicated region
  $region2: #{moco_forward.6} parent=0 // pred_check
    _
  $region3: #{moco_forward.6} parent=0 // pred_check_branch
    %18 = sbr.rel (0) target = $region5
  $region4: #{moco_forward.6} parent=0 // pred_region
    _
  $region5: #{moco_forward.6} parent=0 // pred_fallthru
    _
  // Predicated region
  $region6: #{moco_forward.6} parent=0 // pred_check
    _
  $region7: #{moco_forward.6} parent=0 // pred_check_branch
    %20 = sbr.rel (0) target = $region9
  $region8: #{moco_forward.6} parent=0 // pred_region
    _
  $region9: #{moco_forward.6} parent=0 // pred_fallthru
    _
  // Predicated region
  $region10: #{moco_forward.6} parent=0 // pred_check
    _
  $region11: #{moco_forward.6} parent=0 // pred_check_branch
    %22 = sbr.rel (0) target = $region13
  $region12: #{moco_forward.6} parent=0 // pred_region
    _
  $region13: #{moco_forward.6} parent=0 // pred_fallthru
    _
  // Predicated region
  $region14: #{moco_forward.6} parent=0 // pred_check
    _
  $region15: #{moco_forward.6} parent=0 // pred_check_branch
    %24 = sbr.rel (0) target = $region17
  $region16: #{moco_forward.6} parent=0 // pred_region
    _
  $region17: #{moco_forward.6} parent=0 // pred_fallthru
    _
  // Predicated region
  $region18: #{moco_forward.6} parent=0 // pred_check
    _
  $region19: #{moco_forward.6} parent=0 // pred_check_branch
    %26 = sbr.rel (0) target = $region21
  $region20: #{moco_forward.6} parent=0 // pred_region
    _
  $region21: #{moco_forward.6} parent=0 // pred_fallthru
    _
  // Predicated region
  $region22: #{moco_forward.6} parent=0 // pred_check
    _
  $region23: #{moco_forward.6} parent=0 // pred_check_branch
    %28 = sbr.rel (0) target = $region25
  $region24: #{moco_forward.6} parent=0 // pred_region
    _
  $region25: #{moco_forward.6} parent=0 // pred_fallthru
    _
  // Predicated region
  $region26: #{moco_forward.6} parent=0 // pred_check
    _
  $region27: #{moco_forward.6} parent=0 // pred_check_branch
    %30 = sbr.rel (0) target = $region29
  $region28: #{moco_forward.6} parent=0 // pred_region
    _
  $region29: #{moco_forward.6} parent=0 // pred_fallthru
    _
  // Predicated region
  $region30: #{moco_forward.6} parent=0 // pred_check
    _
  $region31: #{moco_forward.6} parent=0 // pred_check_branch
    %32 = sbr.rel (0) target = $region33
  $region32: #{moco_forward.6} parent=0 // pred_region
    _
  $region33: #{moco_forward.6} parent=0 // pred_fallthru
    _
  // Predicated region
  $region34: #{moco_forward.6} parent=0 // pred_check
    _
  $region35: #{moco_forward.6} parent=0 // pred_check_branch
    %34 = sbr.rel (0) target = $region37
  $region36: #{moco_forward.6} parent=0 // pred_region
    _
  $region37: #{moco_forward.6} parent=0 // pred_fallthru
    _
  // Predicated region
  $region38: #{moco_forward.6} parent=0 // pred_check
    _
  $region39: #{moco_forward.6} parent=0 // pred_check_branch
    %36 = sbr.rel (0) target = $region41
  $region40: #{moco_forward.6} parent=0 // pred_region
    _
  $region41: #{moco_forward.6} parent=0 // pred_fallthru
    _
  %v38 = vld [vmem:[%s0] sm:$0x3]
  %v39 = vpack.c.bf16 %v38, %v38
  %v40 = vld [vmem:[%s2] sm:$0xf]
  %v41 = vld [vmem:[%s2 + $0x4] sm:$0xf]
  %v42 = vld [vmem:[%s2 + $0x8] sm:$0xf]
  %v43 = vld [vmem:[%s2 + $0xc] sm:$0xf]
  %v44 = vld [vmem:[%s2 + $0x10] sm:$0xf]
  %v45 = vld [vmem:[%s2 + $0x14] sm:$0xf]
  %v46 = vld [vmem:[%s2 + $0x18] sm:$0xf]
  %v47 = vld [vmem:[%s2 + $0x1c] sm:$0xf]
  %v48 = vld [vmem:[%s2 + $0x20] sm:$0xf]
  %v49 = vld [vmem:[%s2 + $0x24] sm:$0xf]
  %v50 = vld [vmem:[%s2 + $0x28] sm:$0xf]
  %v51 = vld [vmem:[%s2 + $0x2c] sm:$0xf]
  %v52 = vld [vmem:[%s2 + $0x30] sm:$0xf]
  %v53 = vld [vmem:[%s2 + $0x34] sm:$0xf]
  %v54 = vld [vmem:[%s2 + $0x38] sm:$0xf]
  %v55 = vld [vmem:[%s2 + $0x3c] sm:$0xf]
  %v56 = vld [vmem:[%s3] sm:$0x1]
  %v58 = vperm.slane %v56, 0
  %v76 = vunpack.c.l.b16 %v40
  %v77 = vunpack.c.l.b16 %v41
  %v78 = vunpack.c.l.b16 %v42
  %v79 = vunpack.c.l.b16 %v43
  %v80 = vunpack.c.l.b16 %v44
  %v81 = vunpack.c.l.b16 %v45
  %v82 = vunpack.c.l.b16 %v46
  %v83 = vunpack.c.l.b16 %v47
  %v84 = vunpack.c.l.b16 %v48
  %v85 = vunpack.c.l.b16 %v49
  %v86 = vunpack.c.l.b16 %v50
  %v87 = vunpack.c.l.b16 %v51
  %v88 = vunpack.c.l.b16 %v52
  %v89 = vunpack.c.l.b16 %v53
  %v90 = vunpack.c.l.b16 %v54
  %v91 = vunpack.c.l.b16 %v55
  %v92 = vpack.c.b16 %v77, %v76
  %v93 = vpack.c.b16 %v79, %v78
  %v94 = vpack.c.b16 %v81, %v80
  %v95 = vpack.c.b16 %v83, %v82
  %v96 = vpack.c.b16 %v85, %v84
  %v97 = vpack.c.b16 %v87, %v86
  %v98 = vpack.c.b16 %v89, %v88
  %v99 = vpack.c.b16 %v91, %v90
  %108 = vmatpush.bf16.msra.mxu0 %v99
  %109 = vmatpush.bf16.msra.mxu0 %v98
  %110 = vmatpush.bf16.msra.mxu0 %v97
  %111 = vmatpush.bf16.msra.mxu0 %v96
  %112 = vmatpush.bf16.msra.mxu0 %v95
  %113 = vmatpush.bf16.msra.mxu0 %v94
  %114 = vmatpush.bf16.msra.mxu0 %v93
  %115 = vmatpush.bf16.msra.mxu0 %v92
  %116 = vmatmul.bf16.gmra.mxu0 %v39
  %v117 = vpop.f32.mrf.mxu0
  %v118 = vadd.f32 %v58, %v117
  %v119 = vpop.f32.mrf.mxu0
  %120 = vdwg.mxu0
  %v121 = vmax.f32 %v118, 0.0
  %v122 = vpack.c.bf16 %v121, %v121
  %v123 = vld [vmem:[%s4] sm:$0xf]
  %v124 = vld [vmem:[%s4 + $0x4] sm:$0xf]
  %v125 = vld [vmem:[%s4 + $0x8] sm:$0xf]
  %v126 = vld [vmem:[%s4 + $0xc] sm:$0xf]
  %v127 = vld [vmem:[%s5] sm:$0x1]
  %v129 = vperm.slane %v127, 0
  %v135 = vunpack.c.l.b16 %v123
  %v136 = vunpack.c.l.b16 %v124
  %v137 = vunpack.c.l.b16 %v125
  %v138 = vunpack.c.l.b16 %v126
  %v139 = vpack.c.b16 %v136, %v135
  %v140 = vpack.c.b16 %v138, %v137
  %vm143 = vcmask 261120
  %v145 = vsel %vm143, %v122, 0
  %147 = vmatpush.bf16.msra.mxu0 0
  %148 = vmatpush.bf16.msra.mxu0 0
  %149 = vmatpush.bf16.msra.mxu0 0
  %150 = vmatpush.bf16.msra.mxu0 0
  %151 = vmatpush.bf16.msra.mxu0 0
  %152 = vmatpush.bf16.msra.mxu0 0
  %153 = vmatpush.bf16.msra.mxu0 %v140
  %154 = vmatpush.bf16.msra.mxu0 %v139
  %155 = vmatmul.bf16.gmra.mxu0 %v145
  %v156 = vpop.f32.mrf.mxu0
  %v157 = vadd.f32 %v129, %v156
  %v158 = vpop.f32.mrf.mxu0
  %159 = vdwg.mxu0
  %v160 = vmul.f32 %v157, %v157
  %vm161 = vcmask 123904
  %v162 = vsel %vm161, %v160, 0.0
  %163 = vadd.xlane.f32.xlu0 %v162
  %v164 = vpop.xlane.xlu0 %163
  %v165 = vmax.f32 %v164, 1e-24
  %v166 = vrsqrt.pop %v165
  %v167 = vmul.f32 %v166, %v165
  %v168 = vmul.f32 %v167, %v166
  %v169 = vmul.f32 0.5, %v168
  %v170 = vsub.f32 1.5, %v169
  %v171 = vmul.f32 %v166, %v170
  %vm172 = vweird.f32 %v165
  %vm173 = vweird.f32 %v166
  %vm174 = vmor %vm172, %vm173
  %v175 = vsel %vm174, %v166, %v171
  %v176 = vmul.f32 %v157, %v175
  %177 = vst.msk [vmem:[%s10] sm:$0x3] %vm161, %v176
  %v178 = vld [vmem:[%s1] sm:$0x3]
  %v179 = vpack.c.bf16 %v178, %v178
  %v180 = vld [vmem:[%s6] sm:$0xf]
  %v181 = vld [vmem:[%s6 + $0x4] sm:$0xf]
  %v182 = vld [vmem:[%s6 + $0x8] sm:$0xf]
  %v183 = vld [vmem:[%s6 + $0xc] sm:$0xf]
  %v184 = vld [vmem:[%s6 + $0x10] sm:$0xf]
  %v185 = vld [vmem:[%s6 + $0x14] sm:$0xf]
  %v186 = vld [vmem:[%s6 + $0x18] sm:$0xf]
  %v187 = vld [vmem:[%s6 + $0x1c] sm:$0xf]
  %v188 = vld [vmem:[%s6 + $0x20] sm:$0xf]
  %v189 = vld [vmem:[%s6 + $0x24] sm:$0xf]
  %v190 = vld [vmem:[%s6 + $0x28] sm:$0xf]
  %v191 = vld [vmem:[%s6 + $0x2c] sm:$0xf]
  %v192 = vld [vmem:[%s6 + $0x30] sm:$0xf]
  %v193 = vld [vmem:[%s6 + $0x34] sm:$0xf]
  %v194 = vld [vmem:[%s6 + $0x38] sm:$0xf]
  %v195 = vld [vmem:[%s6 + $0x3c] sm:$0xf]
  %v196 = vld [vmem:[%s7] sm:$0x1]
  %v198 = vperm.slane %v196, 0
  %v216 = vunpack.c.l.b16 %v180
  %v217 = vunpack.c.l.b16 %v181
  %v218 = vunpack.c.l.b16 %v182
  %v219 = vunpack.c.l.b16 %v183
  %v220 = vunpack.c.l.b16 %v184
  %v221 = vunpack.c.l.b16 %v185
  %v222 = vunpack.c.l.b16 %v186
  %v223 = vunpack.c.l.b16 %v187
  %v224 = vunpack.c.l.b16 %v188
  %v225 = vunpack.c.l.b16 %v189
  %v226 = vunpack.c.l.b16 %v190
  %v227 = vunpack.c.l.b16 %v191
  %v228 = vunpack.c.l.b16 %v192
  %v229 = vunpack.c.l.b16 %v193
  %v230 = vunpack.c.l.b16 %v194
  %v231 = vunpack.c.l.b16 %v195
  %v232 = vpack.c.b16 %v217, %v216
  %v233 = vpack.c.b16 %v219, %v218
  %v234 = vpack.c.b16 %v221, %v220
  %v235 = vpack.c.b16 %v223, %v222
  %v236 = vpack.c.b16 %v225, %v224
  %v237 = vpack.c.b16 %v227, %v226
  %v238 = vpack.c.b16 %v229, %v228
  %v239 = vpack.c.b16 %v231, %v230
  %248 = vmatpush.bf16.msra.mxu0 %v239
  %249 = vmatpush.bf16.msra.mxu0 %v238
  %250 = vmatpush.bf16.msra.mxu0 %v237
  %251 = vmatpush.bf16.msra.mxu0 %v236
  %252 = vmatpush.bf16.msra.mxu0 %v235
  %253 = vmatpush.bf16.msra.mxu0 %v234
  %254 = vmatpush.bf16.msra.mxu0 %v233
  %255 = vmatpush.bf16.msra.mxu0 %v232
  %256 = vmatmul.bf16.gmra.mxu0 %v179
  %v257 = vpop.f32.mrf.mxu0
  %v258 = vadd.f32 %v198, %v257
  %v259 = vpop.f32.mrf.mxu0
  %260 = vdwg.mxu0
  %v261 = vmax.f32 %v258, 0.0
  %v262 = vpack.c.bf16 %v261, %v261
  %v263 = vld [vmem:[%s8] sm:$0xf]
  %v264 = vld [vmem:[%s8 + $0x4] sm:$0xf]
  %v265 = vld [vmem:[%s8 + $0x8] sm:$0xf]
  %v266 = vld [vmem:[%s8 + $0xc] sm:$0xf]
  %v267 = vld [vmem:[%s9] sm:$0x1]
  %v269 = vperm.slane %v267, 0
  %v275 = vunpack.c.l.b16 %v263
  %v276 = vunpack.c.l.b16 %v264
  %v277 = vunpack.c.l.b16 %v265
  %v278 = vunpack.c.l.b16 %v266
  %v279 = vpack.c.b16 %v276, %v275
  %v280 = vpack.c.b16 %v278, %v277
  %v284 = vsel %vm143, %v262, 0
  %286 = vmatpush.bf16.msra.mxu0 0
  %287 = vmatpush.bf16.msra.mxu0 0
  %288 = vmatpush.bf16.msra.mxu0 0
  %289 = vmatpush.bf16.msra.mxu0 0
  %290 = vmatpush.bf16.msra.mxu0 0
  %291 = vmatpush.bf16.msra.mxu0 0
  %292 = vmatpush.bf16.msra.mxu0 %v280
  %293 = vmatpush.bf16.msra.mxu0 %v279
  %294 = vmatmul.bf16.gmra.mxu0 %v284
  %v295 = vpop.f32.mrf.mxu0
  %v296 = vadd.f32 %v269, %v295
  %v297 = vpop.f32.mrf.mxu0
  %298 = vdwg.mxu0
  %v299 = vmul.f32 %v296, %v296
  %v300 = vsel %vm161, %v299, 0.0
  %301 = vadd.xlane.f32.xlu0 %v300
  %v302 = vpop.xlane.xlu0 %301
  %v303 = vmax.f32 %v302, 1e-24
  %v304 = vrsqrt.pop %v303
  %v305 = vmul.f32 %v304, %v303
  %v306 = vmul.f32 %v305, %v304
  %v307 = vmul.f32 0.5, %v306
  %v308 = vsub.f32 1.5, %v307
  %v309 = vmul.f32 %v304, %v308
  %vm310 = vweird.f32 %v303
  %vm311 = vweird.f32 %v304
  %vm312 = vmor %vm310, %vm311
  %v313 = vsel %vm312, %v304, %v309
  %v314 = vmul.f32 %v296, %v313
  %315 = vst.msk [vmem:[%s11] sm:$0x3] %vm161, %v314
  // Predicated region
  $region42: #{moco_forward.6} parent=0 // pred_check
    _
  $region43: #{moco_forward.6} parent=0 // pred_check_branch
    %317 = sbr.rel (0) target = $region45
  $region44: #{moco_forward.6} parent=0 // pred_region
    _
  $region45: #{moco_forward.6} parent=0 // pred_fallthru
    _
  // Predicated region
  $region46: #{moco_forward.6} parent=0 // pred_check
    _
  $region47: #{moco_forward.6} parent=0 // pred_check_branch
    %319 = sbr.rel (0) target = $region49
  $region48: #{moco_forward.6} parent=0 // pred_region
    _
  $region49: #{moco_forward.6} parent=0 // pred_fallthru
    _
  // Predicated region
  $region50: #{moco_forward.6} parent=0 // pred_check
    _
  $region51: #{moco_forward.6} parent=0 // pred_check_branch
    %321 = sbr.rel (0) target = $region53
  $region52: #{moco_forward.6} parent=0 // pred_region
    _
  $region53: #{moco_forward.6} parent=0 // pred_fallthru
    _
  // Predicated region
  $region54: #{moco_forward.6} parent=0 // pred_check
    _
  $region55: #{moco_forward.6} parent=0 // pred_check_branch
    %323 = sbr.rel (0) target = $region57
  $region56: #{moco_forward.6} parent=0 // pred_region
    _
  $region57: #{moco_forward.6} parent=0 // pred_fallthru
    _

// kernel: moco_forward.5
$region0: #{moco_forward.5}
  #allocation0 [shape = 'u32[]', space=smem, size = 0x4, offset = 0x4, fixed_abs, tag = 'smem constant byte address 0x4 - core index']
  #allocation1 [shape = 'u32[72,128]{1,0:T(1,128)}', space=vmem, size = 0x9000, scoped, tag = 'internal scratch']
  %s0 = inlined_call_operand.vmem [shape: bf16[512,27], index: 0, kind: input, shape index: {}]
  %s1 = inlined_call_operand.vmem [shape: bf16[27,128], index: 1, kind: input, shape index: {}]
  %s2 = inlined_call_operand.vmem [shape: f32[1,128], index: 2, kind: input, shape index: {}]
  %s3 = inlined_call_operand.vmem [shape: f32[2,128], index: 3, kind: output, shape index: {}]
  %s4 = sld [smem:[#allocation0]]
  $region22: #{moco_forward.5} parent=0
    _
  %s6 = ssub.s32 1, %s4
  %s7 = scalar_select 0, %s6, %s4
  // Predicated region
  $region2: #{moco_forward.5} parent=0 // pred_check
    _
  $region3: #{moco_forward.5} parent=0 // pred_check_branch
    %9 = sbr.rel (0) target = $region5
  $region4: #{moco_forward.5} parent=0 // pred_region
    _
  $region5: #{moco_forward.5} parent=0 // pred_fallthru
    _
  // Predicated region
  $region6: #{moco_forward.5} parent=0 // pred_check
    _
  $region7: #{moco_forward.5} parent=0 // pred_check_branch
    %11 = sbr.rel (0) target = $region9
  $region8: #{moco_forward.5} parent=0 // pred_region
    _
  $region9: #{moco_forward.5} parent=0 // pred_fallthru
    _
  // Predicated region
  $region10: #{moco_forward.5} parent=0 // pred_check
    _
  $region11: #{moco_forward.5} parent=0 // pred_check_branch
    %13 = sbr.rel (0) target = $region13
  $region12: #{moco_forward.5} parent=0 // pred_region
    _
  $region13: #{moco_forward.5} parent=0 // pred_fallthru
    _
  %v15 = vld [vmem:[%s0] sm:$0xf]
  %v16 = vld [vmem:[%s0 + $0x4] sm:$0xf]
  %v17 = vld [vmem:[%s0 + $0x8] sm:$0xf]
  %v18 = vld [vmem:[%s0 + $0xc] sm:$0xf]
  %v19 = vld [vmem:[%s0 + $0x10] sm:$0xf]
  %v20 = vld [vmem:[%s0 + $0x14] sm:$0xf]
  %v21 = vld [vmem:[%s0 + $0x18] sm:$0xf]
  %v22 = vld [vmem:[%s0 + $0x1c] sm:$0xf]
  %v23 = vld [vmem:[%s0 + $0x20] sm:$0xf]
  %v24 = vld [vmem:[%s0 + $0x24] sm:$0xf]
  %v25 = vld [vmem:[%s0 + $0x28] sm:$0xf]
  %v26 = vld [vmem:[%s0 + $0x2c] sm:$0xf]
  %v27 = vld [vmem:[%s0 + $0x30] sm:$0xf]
  %v28 = vld [vmem:[%s0 + $0x34] sm:$0xf]
  %v29 = vld [vmem:[%s0 + $0x38] sm:$0xf]
  %v30 = vld [vmem:[%s0 + $0x3c] sm:$0xf]
  %v31 = vld [vmem:[%s0 + $0x40] sm:$0xf]
  %v32 = vld [vmem:[%s0 + $0x44] sm:$0xf]
  %v33 = vld [vmem:[%s0 + $0x48] sm:$0xf]
  %v34 = vld [vmem:[%s0 + $0x4c] sm:$0xf]
  %v35 = vld [vmem:[%s0 + $0x50] sm:$0xf]
  %v36 = vld [vmem:[%s0 + $0x54] sm:$0xf]
  %v37 = vld [vmem:[%s0 + $0x58] sm:$0xf]
  %v38 = vld [vmem:[%s0 + $0x5c] sm:$0xf]
  %v39 = vld [vmem:[%s0 + $0x60] sm:$0xf]
  %v40 = vld [vmem:[%s0 + $0x64] sm:$0xf]
  %v41 = vld [vmem:[%s0 + $0x68] sm:$0xf]
  %v42 = vld [vmem:[%s0 + $0x6c] sm:$0xf]
  %v43 = vld [vmem:[%s0 + $0x70] sm:$0xf]
  %v44 = vld [vmem:[%s0 + $0x74] sm:$0xf]
  %v45 = vld [vmem:[%s0 + $0x78] sm:$0xf]
  %v46 = vld [vmem:[%s0 + $0x7c] sm:$0xf]
  %v47 = vld [vmem:[%s0 + $0x80] sm:$0xf]
  %v48 = vld [vmem:[%s0 + $0x84] sm:$0xf]
  %v49 = vld [vmem:[%s0 + $0x88] sm:$0xf]
  %v50 = vld [vmem:[%s0 + $0x8c] sm:$0xf]
  %v51 = vld [vmem:[%s0 + $0x90] sm:$0xf]
  %v52 = vld [vmem:[%s0 + $0x94] sm:$0xf]
  %v53 = vld [vmem:[%s0 + $0x98] sm:$0xf]
  %v54 = vld [vmem:[%s0 + $0x9c] sm:$0xf]
  %v55 = vld [vmem:[%s0 + $0xa0] sm:$0xf]
  %v56 = vld [vmem:[%s0 + $0xa4] sm:$0xf]
  %v57 = vld [vmem:[%s0 + $0xa8] sm:$0xf]
  %v58 = vld [vmem:[%s0 + $0xac] sm:$0xf]
  %v59 = vld [vmem:[%s0 + $0xb0] sm:$0xf]
  %v60 = vld [vmem:[%s0 + $0xb4] sm:$0xf]
  %v61 = vld [vmem:[%s0 + $0xb8] sm:$0xf]
  %v62 = vld [vmem:[%s0 + $0xbc] sm:$0xf]
  %v63 = vld [vmem:[%s0 + $0xc0] sm:$0xf]
  %v64 = vld [vmem:[%s0 + $0xc4] sm:$0xf]
  %v65 = vld [vmem:[%s0 + $0xc8] sm:$0xf]
  %v66 = vld [vmem:[%s0 + $0xcc] sm:$0xf]
  %v67 = vld [vmem:[%s0 + $0xd0] sm:$0xf]
  %v68 = vld [vmem:[%s0 + $0xd4] sm:$0xf]
  %v69 = vld [vmem:[%s0 + $0xd8] sm:$0xf]
  %v70 = vld [vmem:[%s0 + $0xdc] sm:$0xf]
  %v71 = vld [vmem:[%s0 + $0xe0] sm:$0xf]
  %v72 = vld [vmem:[%s0 + $0xe4] sm:$0xf]
  %v73 = vld [vmem:[%s0 + $0xe8] sm:$0xf]
  %v74 = vld [vmem:[%s0 + $0xec] sm:$0xf]
  %v75 = vld [vmem:[%s0 + $0xf0] sm:$0xf]
  %v76 = vld [vmem:[%s0 + $0xf4] sm:$0xf]
  %v77 = vld [vmem:[%s0 + $0xf8] sm:$0xf]
  %v78 = vld [vmem:[%s0 + $0xfc] sm:$0xf]
  %v79 = vld [vmem:[%s1] sm:$0xf]
  %v80 = vld [vmem:[%s1 + $0x4] sm:$0xf]
  %v81 = vld [vmem:[%s1 + $0x8] sm:$0xf]
  %v82 = vld [vmem:[%s1 + $0xc] sm:$0x3]
  %v83 = vld [vmem:[%s2] sm:$0x1]
  %v85 = vperm.slane %v83, 0
  %v151 = vunpack.c.l.b16 %v15
  %v152 = vunpack.c.l.b16 %v16
  %v153 = vunpack.c.l.b16 %v17
  %v154 = vunpack.c.l.b16 %v18
  %v155 = vunpack.c.l.b16 %v19
  %v156 = vunpack.c.l.b16 %v20
  %v157 = vunpack.c.l.b16 %v21
  %v158 = vunpack.c.l.b16 %v22
  %v159 = vunpack.c.l.b16 %v23
  %v160 = vunpack.c.l.b16 %v24
  %v161 = vunpack.c.l.b16 %v25
  %v162 = vunpack.c.l.b16 %v26
  %v163 = vunpack.c.l.b16 %v27
  %v164 = vunpack.c.l.b16 %v28
  %v165 = vunpack.c.l.b16 %v29
  %v166 = vunpack.c.l.b16 %v30
  %v167 = vunpack.c.l.b16 %v31
  %v168 = vunpack.c.l.b16 %v32
  %v169 = vunpack.c.l.b16 %v33
  %v170 = vunpack.c.l.b16 %v34
  %v171 = vunpack.c.l.b16 %v35
  %v172 = vunpack.c.l.b16 %v36
  %v173 = vunpack.c.l.b16 %v37
  %v174 = vunpack.c.l.b16 %v38
  %v175 = vunpack.c.l.b16 %v39
  %v176 = vunpack.c.l.b16 %v40
  %v177 = vunpack.c.l.b16 %v41
  %v178 = vunpack.c.l.b16 %v42
  %v179 = vunpack.c.l.b16 %v43
  %v180 = vunpack.c.l.b16 %v44
  %v181 = vunpack.c.l.b16 %v45
  %v182 = vunpack.c.l.b16 %v46
  %v183 = vunpack.c.l.b16 %v47
  %v184 = vunpack.c.l.b16 %v48
  %v185 = vunpack.c.l.b16 %v49
  %v186 = vunpack.c.l.b16 %v50
  %v187 = vunpack.c.l.b16 %v51
  %v188 = vunpack.c.l.b16 %v52
  %v189 = vunpack.c.l.b16 %v53
  %v190 = vunpack.c.l.b16 %v54
  %v191 = vunpack.c.l.b16 %v55
  %v192 = vunpack.c.l.b16 %v56
  %v193 = vunpack.c.l.b16 %v57
  %v194 = vunpack.c.l.b16 %v58
  %v195 = vunpack.c.l.b16 %v59
  %v196 = vunpack.c.l.b16 %v60
  %v197 = vunpack.c.l.b16 %v61
  %v198 = vunpack.c.l.b16 %v62
  %v199 = vunpack.c.l.b16 %v63
  %v200 = vunpack.c.l.b16 %v64
  %v201 = vunpack.c.l.b16 %v65
  %v202 = vunpack.c.l.b16 %v66
  %v203 = vunpack.c.l.b16 %v67
  %v204 = vunpack.c.l.b16 %v68
  %v205 = vunpack.c.l.b16 %v69
  %v206 = vunpack.c.l.b16 %v70
  %v207 = vunpack.c.l.b16 %v71
  %v208 = vunpack.c.l.b16 %v72
  %v209 = vunpack.c.l.b16 %v73
  %v210 = vunpack.c.l.b16 %v74
  %v211 = vunpack.c.l.b16 %v75
  %v212 = vunpack.c.l.b16 %v76
  %v213 = vunpack.c.l.b16 %v77
  %v214 = vunpack.c.l.b16 %v78
  %v215 = vpack.c.b16 %v152, %v151
  %v216 = vpack.c.b16 %v154, %v153
  %v217 = vpack.c.b16 %v156, %v155
  %v218 = vpack.c.b16 %v158, %v157
  %v219 = vpack.c.b16 %v160, %v159
  %v220 = vpack.c.b16 %v162, %v161
  %v221 = vpack.c.b16 %v164, %v163
  %v222 = vpack.c.b16 %v166, %v165
  %v223 = vpack.c.b16 %v168, %v167
  %v224 = vpack.c.b16 %v170, %v169
  %v225 = vpack.c.b16 %v172, %v171
  %v226 = vpack.c.b16 %v174, %v173
  %v227 = vpack.c.b16 %v176, %v175
  %v228 = vpack.c.b16 %v178, %v177
  %v229 = vpack.c.b16 %v180, %v179
  %v230 = vpack.c.b16 %v182, %v181
  %v231 = vpack.c.b16 %v184, %v183
  %v232 = vpack.c.b16 %v186, %v185
  %v233 = vpack.c.b16 %v188, %v187
  %v234 = vpack.c.b16 %v190, %v189
  %v235 = vpack.c.b16 %v192, %v191
  %v236 = vpack.c.b16 %v194, %v193
  %v237 = vpack.c.b16 %v196, %v195
  %v238 = vpack.c.b16 %v198, %v197
  %v239 = vpack.c.b16 %v200, %v199
  %v240 = vpack.c.b16 %v202, %v201
  %v241 = vpack.c.b16 %v204, %v203
  %v242 = vpack.c.b16 %v206, %v205
  %v243 = vpack.c.b16 %v208, %v207
  %v244 = vpack.c.b16 %v210, %v209
  %v245 = vpack.c.b16 %v212, %v211
  %v246 = vpack.c.b16 %v214, %v213
  %v251 = vunpack.c.l.b16 %v79
  %v252 = vunpack.c.l.b16 %v80
  %v253 = vunpack.c.l.b16 %v81
  %v254 = vunpack.c.l.b16 %v82
  %v255 = vpack.c.b16 %v252, %v251
  %v256 = vpack.c.b16 %v254, %v253
  %vm258 = vcmask 220160
  %v260 = vsel %vm258, %v215, 0
  %v263 = vsel %vm258, %v216, 0
  %v266 = vsel %vm258, %v217, 0
  %v269 = vsel %vm258, %v218, 0
  %v272 = vsel %vm258, %v219, 0
  %v275 = vsel %vm258, %v220, 0
  %v278 = vsel %vm258, %v221, 0
  %v281 = vsel %vm258, %v222, 0
  %v284 = vsel %vm258, %v223, 0
  %v287 = vsel %vm258, %v224, 0
  %v290 = vsel %vm258, %v225, 0
  %v293 = vsel %vm258, %v226, 0
  %v296 = vsel %vm258, %v227, 0
  %v299 = vsel %vm258, %v228, 0
  %v302 = vsel %vm258, %v229, 0
  %v305 = vsel %vm258, %v230, 0
  %v308 = vsel %vm258, %v231, 0
  %v311 = vsel %vm258, %v232, 0
  %v314 = vsel %vm258, %v233, 0
  %v317 = vsel %vm258, %v234, 0
  %v320 = vsel %vm258, %v235, 0
  %v323 = vsel %vm258, %v236, 0
  %v326 = vsel %vm258, %v237, 0
  %v329 = vsel %vm258, %v238, 0
  %v332 = vsel %vm258, %v239, 0
  %v335 = vsel %vm258, %v240, 0
  %v338 = vsel %vm258, %v241, 0
  %v341 = vsel %vm258, %v242, 0
  %v344 = vsel %vm258, %v243, 0
  %v347 = vsel %vm258, %v244, 0
  %v350 = vsel %vm258, %v245, 0
  %v353 = vsel %vm258, %v246, 0
  %vm355 = vcmask 1044480
  %vm356 = vcmask 1045504
  %v357 = vsel %vm355, 4294967295, 65535
  %v358 = vsel %vm356, %v357, 0
  %v360 = vand.u32 %v256, %v358
  %362 = vmatpush.bf16.msra.mxu0 0
  %363 = vmatpush.bf16.msra.mxu0 0
  %364 = vmatpush.bf16.msra.mxu0 0
  %365 = vmatpush.bf16.msra.mxu0 0
  %366 = vmatpush.bf16.msra.mxu0 0
  %367 = vmatpush.bf16.msra.mxu0 0
  %368 = vmatpush.bf16.msra.mxu0 %v360
  %369 = vmatpush.bf16.msra.mxu0 %v255
  %370 = vmatmul.bf16.gmra.mxu0 %v260
  %v371 = vpop.f32.mrf.mxu0
  %v372 = vadd.f32 %v85, %v371
  %v373 = vpop.f32.mrf.mxu0
  %v374 = vadd.f32 %v85, %v373
  %375 = vmatmul.bf16.gmra.mxu0 %v263
  %v376 = vpop.f32.mrf.mxu0
  %v377 = vadd.f32 %v85, %v376
  %v378 = vpop.f32.mrf.mxu0
  %v379 = vadd.f32 %v85, %v378
  %380 = vmatmul.bf16.gmra.mxu0 %v266
  %v381 = vpop.f32.mrf.mxu0
  %v382 = vadd.f32 %v85, %v381
  %v383 = vpop.f32.mrf.mxu0
  %v384 = vadd.f32 %v85, %v383
  %385 = vmatmul.bf16.gmra.mxu0 %v269
  %v386 = vpop.f32.mrf.mxu0
  %v387 = vadd.f32 %v85, %v386
  %v388 = vpop.f32.mrf.mxu0
  %v389 = vadd.f32 %v85, %v388
  %390 = vmatmul.bf16.gmra.mxu0 %v272
  %v391 = vpop.f32.mrf.mxu0
  %v392 = vadd.f32 %v85, %v391
  %v393 = vpop.f32.mrf.mxu0
  %v394 = vadd.f32 %v85, %v393
  %395 = vmatmul.bf16.gmra.mxu0 %v275
  %v396 = vpop.f32.mrf.mxu0
  %v397 = vadd.f32 %v85, %v396
  %v398 = vpop.f32.mrf.mxu0
  %v399 = vadd.f32 %v85, %v398
  %400 = vmatmul.bf16.gmra.mxu0 %v278
  %v401 = vpop.f32.mrf.mxu0
  %v402 = vadd.f32 %v85, %v401
  %v403 = vpop.f32.mrf.mxu0
  %v404 = vadd.f32 %v85, %v403
  %405 = vmatmul.bf16.gmra.mxu0 %v281
  %v406 = vpop.f32.mrf.mxu0
  %v407 = vadd.f32 %v85, %v406
  %v408 = vpop.f32.mrf.mxu0
  %v409 = vadd.f32 %v85, %v408
  %410 = vmatmul.bf16.gmra.mxu0 %v284
  %v411 = vpop.f32.mrf.mxu0
  %v412 = vadd.f32 %v85, %v411
  %v413 = vpop.f32.mrf.mxu0
  %v414 = vadd.f32 %v85, %v413
  %415 = vmatmul.bf16.gmra.mxu0 %v287
  %v416 = vpop.f32.mrf.mxu0
  %v417 = vadd.f32 %v85, %v416
  %v418 = vpop.f32.mrf.mxu0
  %v419 = vadd.f32 %v85, %v418
  %420 = vmatmul.bf16.gmra.mxu0 %v290
  %v421 = vpop.f32.mrf.mxu0
  %v422 = vadd.f32 %v85, %v421
  %v423 = vpop.f32.mrf.mxu0
  %v424 = vadd.f32 %v85, %v423
  %425 = vmatmul.bf16.gmra.mxu0 %v293
  %v426 = vpop.f32.mrf.mxu0
  %v427 = vadd.f32 %v85, %v426
  %v428 = vpop.f32.mrf.mxu0
  %v429 = vadd.f32 %v85, %v428
  %430 = vmatmul.bf16.gmra.mxu0 %v296
  %v431 = vpop.f32.mrf.mxu0
  %v432 = vadd.f32 %v85, %v431
  %v433 = vpop.f32.mrf.mxu0
  %v434 = vadd.f32 %v85, %v433
  %435 = vmatmul.bf16.gmra.mxu0 %v299
  %v436 = vpop.f32.mrf.mxu0
  %v437 = vadd.f32 %v85, %v436
  %v438 = vpop.f32.mrf.mxu0
  %v439 = vadd.f32 %v85, %v438
  %440 = vmatmul.bf16.gmra.mxu0 %v302
  %v441 = vpop.f32.mrf.mxu0
  %v442 = vadd.f32 %v85, %v441
  %v443 = vpop.f32.mrf.mxu0
  %v444 = vadd.f32 %v85, %v443
  %445 = vmatmul.bf16.gmra.mxu0 %v305
  %v446 = vpop.f32.mrf.mxu0
  %v447 = vadd.f32 %v85, %v446
  %v448 = vpop.f32.mrf.mxu0
  %v449 = vadd.f32 %v85, %v448
  %450 = vmatmul.bf16.gmra.mxu0 %v308
  %v451 = vpop.f32.mrf.mxu0
  %v452 = vadd.f32 %v85, %v451
  %v453 = vpop.f32.mrf.mxu0
  %v454 = vadd.f32 %v85, %v453
  %455 = vmatmul.bf16.gmra.mxu0 %v311
  %v456 = vpop.f32.mrf.mxu0
  %v457 = vadd.f32 %v85, %v456
  %v458 = vpop.f32.mrf.mxu0
  %v459 = vadd.f32 %v85, %v458
  %460 = vmatmul.bf16.gmra.mxu0 %v314
  %v461 = vpop.f32.mrf.mxu0
  %v462 = vadd.f32 %v85, %v461
  %v463 = vpop.f32.mrf.mxu0
  %v464 = vadd.f32 %v85, %v463
  %465 = vmatmul.bf16.gmra.mxu0 %v317
  %v466 = vpop.f32.mrf.mxu0
  %v467 = vadd.f32 %v85, %v466
  %v468 = vpop.f32.mrf.mxu0
  %v469 = vadd.f32 %v85, %v468
  %470 = vmatmul.bf16.gmra.mxu0 %v320
  %v471 = vpop.f32.mrf.mxu0
  %v472 = vadd.f32 %v85, %v471
  %v473 = vpop.f32.mrf.mxu0
  %v474 = vadd.f32 %v85, %v473
  %475 = vmatmul.bf16.gmra.mxu0 %v323
  %v476 = vpop.f32.mrf.mxu0
  %v477 = vadd.f32 %v85, %v476
  %v478 = vpop.f32.mrf.mxu0
  %v479 = vadd.f32 %v85, %v478
  %480 = vmatmul.bf16.gmra.mxu0 %v326
  %v481 = vpop.f32.mrf.mxu0
  %v482 = vadd.f32 %v85, %v481
  %v483 = vpop.f32.mrf.mxu0
  %v484 = vadd.f32 %v85, %v483
  %485 = vmatmul.bf16.gmra.mxu0 %v329
  %v486 = vpop.f32.mrf.mxu0
  %v487 = vadd.f32 %v85, %v486
  %v488 = vpop.f32.mrf.mxu0
  %v489 = vadd.f32 %v85, %v488
  %490 = vmatmul.bf16.gmra.mxu0 %v332
  %v491 = vpop.f32.mrf.mxu0
  %v492 = vadd.f32 %v85, %v491
  %v493 = vpop.f32.mrf.mxu0
  %v494 = vadd.f32 %v85, %v493
  %495 = vmatmul.bf16.gmra.mxu0 %v335
  %v496 = vpop.f32.mrf.mxu0
  %v497 = vadd.f32 %v85, %v496
  %v498 = vpop.f32.mrf.mxu0
  %v499 = vadd.f32 %v85, %v498
  %500 = vmatmul.bf16.gmra.mxu0 %v338
  %v501 = vpop.f32.mrf.mxu0
  %v502 = vadd.f32 %v85, %v501
  %v503 = vpop.f32.mrf.mxu0
  %v504 = vadd.f32 %v85, %v503
  %505 = vmatmul.bf16.gmra.mxu0 %v341
  %v506 = vpop.f32.mrf.mxu0
  %v507 = vadd.f32 %v85, %v506
  %v508 = vpop.f32.mrf.mxu0
  %v509 = vadd.f32 %v85, %v508
  %510 = vmatmul.bf16.gmra.mxu0 %v344
  %v511 = vpop.f32.mrf.mxu0
  %v512 = vadd.f32 %v85, %v511
  %v513 = vpop.f32.mrf.mxu0
  %v514 = vadd.f32 %v85, %v513
  %515 = vmatmul.bf16.gmra.mxu0 %v347
  %v516 = vpop.f32.mrf.mxu0
  %v517 = vadd.f32 %v85, %v516
  %v518 = vpop.f32.mrf.mxu0
  %v519 = vadd.f32 %v85, %v518
  %520 = vmatmul.bf16.gmra.mxu0 %v350
  %v521 = vpop.f32.mrf.mxu0
  %v522 = vadd.f32 %v85, %v521
  %v523 = vpop.f32.mrf.mxu0
  %v524 = vadd.f32 %v85, %v523
  %525 = vmatmul.bf16.gmra.mxu0 %v353
  %v526 = vpop.f32.mrf.mxu0
  %v527 = vadd.f32 %v85, %v526
  %v528 = vpop.f32.mrf.mxu0
  %v529 = vadd.f32 %v85, %v528
  %530 = vdwg.mxu0
  %v531 = vmax.f32 %v372, 0.0
  %v532 = vmax.f32 %v374, 0.0
  %v533 = vmax.f32 %v377, 0.0
  %v534 = vmax.f32 %v379, 0.0
  %v535 = vmax.f32 %v382, 0.0
  %v536 = vmax.f32 %v384, 0.0
  %v537 = vmax.f32 %v387, 0.0
  %v538 = vmax.f32 %v389, 0.0
  %v539 = vmax.f32 %v392, 0.0
  %v540 = vmax.f32 %v394, 0.0
  %v541 = vmax.f32 %v397, 0.0
  %v542 = vmax.f32 %v399, 0.0
  %v543 = vmax.f32 %v402, 0.0
  %v544 = vmax.f32 %v404, 0.0
  %v545 = vmax.f32 %v407, 0.0
  %v546 = vmax.f32 %v409, 0.0
  %v547 = vmax.f32 %v412, 0.0
  %v548 = vmax.f32 %v414, 0.0
  %v549 = vmax.f32 %v417, 0.0
  %v550 = vmax.f32 %v419, 0.0
  %v551 = vmax.f32 %v422, 0.0
  %v552 = vmax.f32 %v424, 0.0
  %v553 = vmax.f32 %v427, 0.0
  %v554 = vmax.f32 %v429, 0.0
  %v555 = vmax.f32 %v432, 0.0
  %v556 = vmax.f32 %v434, 0.0
  %v557 = vmax.f32 %v437, 0.0
  %v558 = vmax.f32 %v439, 0.0
  %v559 = vmax.f32 %v442, 0.0
  %v560 = vmax.f32 %v444, 0.0
  %v561 = vmax.f32 %v447, 0.0
  %v562 = vmax.f32 %v449, 0.0
  %v563 = vmax.f32 %v452, 0.0
  %v564 = vmax.f32 %v454, 0.0
  %v565 = vmax.f32 %v457, 0.0
  %v566 = vmax.f32 %v459, 0.0
  %v567 = vmax.f32 %v462, 0.0
  %v568 = vmax.f32 %v464, 0.0
  %v569 = vmax.f32 %v467, 0.0
  %v570 = vmax.f32 %v469, 0.0
  %v571 = vmax.f32 %v472, 0.0
  %v572 = vmax.f32 %v474, 0.0
  %v573 = vmax.f32 %v477, 0.0
  %v574 = vmax.f32 %v479, 0.0
  %v575 = vmax.f32 %v482, 0.0
  %v576 = vmax.f32 %v484, 0.0
  %v577 = vmax.f32 %v487, 0.0
  %v578 = vmax.f32 %v489, 0.0
  %v579 = vmax.f32 %v492, 0.0
  %v580 = vmax.f32 %v494, 0.0
  %v581 = vmax.f32 %v497, 0.0
  %v582 = vmax.f32 %v499, 0.0
  %v583 = vmax.f32 %v502, 0.0
  %v584 = vmax.f32 %v504, 0.0
  %v585 = vmax.f32 %v507, 0.0
  %v586 = vmax.f32 %v509, 0.0
  %v587 = vmax.f32 %v512, 0.0
  %v588 = vmax.f32 %v514, 0.0
  %v589 = vmax.f32 %v517, 0.0
  %v590 = vmax.f32 %v519, 0.0
  %v591 = vmax.f32 %v522, 0.0
  %v592 = vmax.f32 %v524, 0.0
  %v593 = vmax.f32 %v527, 0.0
  %v594 = vmax.f32 %v529, 0.0
  %v595 = vadd.f32 %v531, %v532
  %v596 = vadd.f32 %v595, %v533
  %v597 = vadd.f32 %v596, %v534
  %v598 = vadd.f32 %v597, %v535
  %v599 = vadd.f32 %v598, %v536
  %v600 = vadd.f32 %v599, %v537
  %v601 = vadd.f32 %v600, %v538
  %v602 = vadd.f32 %v601, %v539
  %v603 = vadd.f32 %v602, %v540
  %v604 = vadd.f32 %v603, %v541
  %v605 = vadd.f32 %v604, %v542
  %v606 = vadd.f32 %v605, %v543
  %v607 = vadd.f32 %v606, %v544
  %v608 = vadd.f32 %v607, %v545
  %v609 = vadd.f32 %v608, %v546
  %v610 = vadd.f32 %v609, %v547
  %v611 = vadd.f32 %v610, %v548
  %v612 = vadd.f32 %v611, %v549
  %v613 = vadd.f32 %v612, %v550
  %v614 = vadd.f32 %v613, %v551
  %v615 = vadd.f32 %v614, %v552
  %v616 = vadd.f32 %v615, %v553
  %v617 = vadd.f32 %v616, %v554
  %v618 = vadd.f32 %v617, %v555
  %v619 = vadd.f32 %v618, %v556
  %v620 = vadd.f32 %v619, %v557
  %v621 = vadd.f32 %v620, %v558
  %v622 = vadd.f32 %v621, %v559
  %v623 = vadd.f32 %v622, %v560
  %v624 = vadd.f32 %v623, %v561
  %v625 = vadd.f32 %v624, %v562
  %v626 = vrot.slane %v625, 4
  %v627 = vadd.f32 %v625, %v626
  %v628 = vrot.slane %v627, 2
  %v629 = vadd.f32 %v627, %v628
  %v630 = vrot.slane %v629, 1
  %v631 = vadd.f32 %v629, %v630
  %v632 = vrcp.pop 256.0
  %v633 = vmul.f32 256.0, %v632
  %v634 = vsub.f32 1.0, %v633
  %v635 = vmul.f32 %v632, %v634
  %v636 = vadd.f32 %v632, %v635
  %vm637 = vweird.f32 %v632
  %v638 = vsel %vm637, %v632, %v636
  %v639 = vmul.f32 %v631, %v638
  %640 = vst [vmem:[%s3] sm:$0x1] %v639
  %v641 = vadd.f32 %v563, %v564
  %v642 = vadd.f32 %v641, %v565
  %v643 = vadd.f32 %v642, %v566
  %v644 = vadd.f32 %v643, %v567
  %v645 = vadd.f32 %v644, %v568
  %v646 = vadd.f32 %v645, %v569
  %v647 = vadd.f32 %v646, %v570
  %v648 = vadd.f32 %v647, %v571
  %v649 = vadd.f32 %v648, %v572
  %v650 = vadd.f32 %v649, %v573
  %v651 = vadd.f32 %v650, %v574
  %v652 = vadd.f32 %v651, %v575
  %v653 = vadd.f32 %v652, %v576
  %v654 = vadd.f32 %v653, %v577
  %v655 = vadd.f32 %v654, %v578
  %v656 = vadd.f32 %v655, %v579
  %v657 = vadd.f32 %v656, %v580
  %v658 = vadd.f32 %v657, %v581
  %v659 = vadd.f32 %v658, %v582
  %v660 = vadd.f32 %v659, %v583
  %v661 = vadd.f32 %v660, %v584
  %v662 = vadd.f32 %v661, %v585
  %v663 = vadd.f32 %v662, %v586
  %v664 = vadd.f32 %v663, %v587
  %v665 = vadd.f32 %v664, %v588
  %v666 = vadd.f32 %v665, %v589
  %v667 = vadd.f32 %v666, %v590
  %v668 = vadd.f32 %v667, %v591
  %v669 = vadd.f32 %v668, %v592
  %v670 = vadd.f32 %v669, %v593
  %v671 = vadd.f32 %v670, %v594
  %v672 = vrot.slane %v671, 4
  %v673 = vadd.f32 %v671, %v672
  %v674 = vrot.slane %v673, 2
  %v675 = vadd.f32 %v673, %v674
  %v676 = vrot.slane %v675, 1
  %v677 = vadd.f32 %v675, %v676
  %v678 = vmul.f32 %v677, %v638
  %679 = vst [vmem:[%s3 + $0x1] sm:$0x1] %v678
  // Predicated region
  $region14: #{moco_forward.5} parent=0 // pred_check
    _
  $region15: #{moco_forward.5} parent=0 // pred_check_branch
    %681 = sbr.rel (0) target = $region17
  $region16: #{moco_forward.5} parent=0 // pred_region
    _
  $region17: #{moco_forward.5} parent=0 // pred_fallthru
    _
  // Predicated region
  $region18: #{moco_forward.5} parent=0 // pred_check
    _
  $region19: #{moco_forward.5} parent=0 // pred_check_branch
    %683 = sbr.rel (0) target = $region21
  $region20: #{moco_forward.5} parent=0 // pred_region
    _
  $region21: #{moco_forward.5} parent=0 // pred_fallthru
    _

// kernel: moco_forward.7
$region0: #{moco_forward.7}
  #allocation0 [shape = 'u32[]', space=smem, size = 0x4, offset = 0x4, fixed_abs, tag = 'smem constant byte address 0x4 - core index']
  #allocation1 [shape = 'u32[72,128]{1,0:T(1,128)}', space=vmem, size = 0x9000, scoped, tag = 'internal scratch']
  %s0 = inlined_call_operand.vmem [shape: f32[2,16], index: 0, kind: input, shape index: {}]
  %s1 = inlined_call_operand.vmem [shape: f32[2,16], index: 1, kind: input, shape index: {}]
  %s2 = inlined_call_operand.vmem [shape: bf16[16,128], index: 2, kind: input, shape index: {}]
  %s3 = inlined_call_operand.hbm [shape: f32[2,128], index: 3, kind: output, shape index: {}]
  %s4 = sld [smem:[#allocation0]]
  $region30: #{moco_forward.7} parent=0
    _
  %s6 = ssub.s32 1, %s4
  %s7 = scalar_select 0, %s6, %s4
  $region1: #{moco_forward.7} parent=0
    #allocation2 [shape = 'u8[1024]{0}', space=vmem, size = 0x400, scoped, tag = 'output window, operand 0, single buffered']
    #allocation3 [shape = 's32[1]{0}', space=sflag, size = 0x4, scoped, tag = 'scoped memory for moco_forward.7']
    %8 = vsyncpa [#allocation3], 0
    // Predicated region
    $region2: #{moco_forward.7} parent=1 // pred_check
      _
    $region3: #{moco_forward.7} parent=1 // pred_check_branch
      %10 = sbr.rel (0) target = $region5
    $region4: #{moco_forward.7} parent=1 // pred_region
      _
    $region5: #{moco_forward.7} parent=1 // pred_fallthru
      _
    // Predicated region
    $region6: #{moco_forward.7} parent=1 // pred_check
      _
    $region7: #{moco_forward.7} parent=1 // pred_check_branch
      %12 = sbr.rel (0) target = $region9
    $region8: #{moco_forward.7} parent=1 // pred_region
      _
    $region9: #{moco_forward.7} parent=1 // pred_fallthru
      _
    // Predicated region
    $region10: #{moco_forward.7} parent=1 // pred_check
      _
    $region11: #{moco_forward.7} parent=1 // pred_check_branch
      %14 = sbr.rel (0) target = $region13
    $region12: #{moco_forward.7} parent=1 // pred_region
      _
    $region13: #{moco_forward.7} parent=1 // pred_fallthru
      _
    %v16 = vld [vmem:[%s0] sm:$0x3]
    %v17 = vpack.c.bf16 %v16, %v16
    %v18 = vld [vmem:[%s2] sm:$0xf]
    %v19 = vld [vmem:[%s2 + $0x4] sm:$0xf]
    %v22 = vunpack.c.l.b16 %v18
    %v23 = vunpack.c.l.b16 %v19
    %v24 = vpack.c.b16 %v23, %v22
    %vm26 = vcmask 130048
    %v28 = vsel %vm26, %v17, 0
    %30 = vmatpush.bf16.msra.mxu0 0
    %31 = vmatpush.bf16.msra.mxu0 0
    %32 = vmatpush.bf16.msra.mxu0 0
    %33 = vmatpush.bf16.msra.mxu0 0
    %34 = vmatpush.bf16.msra.mxu0 0
    %35 = vmatpush.bf16.msra.mxu0 0
    %36 = vmatpush.bf16.msra.mxu0 0
    %37 = vmatpush.bf16.msra.mxu0 %v24
    %38 = vmatmul.bf16.gmra.mxu0 %v28
    %v39 = vpop.f32.mrf.mxu0
    %v40 = vadd.f32 0.0, %v39
    %v41 = vpop.f32.mrf.mxu0
    %42 = vdwg.mxu0
    %v43 = vmul.f32 %v40, 14.285714
    %p44 = scmp.eq.s32.totalorder 0, 0
    // Predicated region
    $region14: #{moco_forward.7} parent=1 // pred_check
      %p45 = pneg %p44
    $region15: #{moco_forward.7} parent=1 // pred_check_branch
      %47 = sbr.rel (%p45) target = $region17
    $region16: #{moco_forward.7} parent=1 // pred_region
      %v48 = vld [vmem:[%s1] sm:$0x3]
      %v49 = vmul.f32 %v16, %v48
      %vm50 = vcmask 123904
      %v51 = vsel %vm50, %v49, 0.0
      %52 = vadd.xlane.f32.xlu0 %v51
      %v53 = vpop.xlane.xlu0 %52
      %v54 = vmul.f32 %v53, 14.285714
      %v55 = vlaneseq
      %v56 = vand.u32 %v55, 127
      %vm57 = vcmp.eq.s32.totalorder %v56, 0
      %v58 = vsel %vm57, %v54, %v43
      %59 = vst [vmem:[#allocation2] sm:$0x3] %v58
    $region17: #{moco_forward.7} parent=1 // pred_fallthru
      _
    %p60 = scmp.ne.s32.totalorder 0, 0
    // Predicated region
    $region18: #{moco_forward.7} parent=1 // pred_check
      %p61 = pneg %p60
    $region19: #{moco_forward.7} parent=1 // pred_check_branch
      %63 = sbr.rel (%p61) target = $region21
    $region20: #{moco_forward.7} parent=1 // pred_region
      %64 = vst [vmem:[#allocation2] sm:$0x3] %v43
    $region21: #{moco_forward.7} parent=1 // pred_fallthru
      _
    // Predicated region
    $region22: #{moco_forward.7} parent=1 // pred_check
      _
    $region23: #{moco_forward.7} parent=1 // pred_check_branch
      %66 = sbr.rel (0) target = $region25
    $region24: #{moco_forward.7} parent=1 // pred_region
      %68 = vsyncadd [#allocation3], 0
      %s70 = sshll.u32 [#allocation2], 4
      %s71 = int_to_ptr.vmem [resolvable:$true] %s70
      %s72 = sshll.u32 %s3, 4
      %s73 = int_to_ptr.hbm [resolvable:$true] %s72
      %75 = dma.vmem_to_hbm [thread:$0]  %s71, 32, %s73, [#allocation3]
    $region25: #{moco_forward.7} parent=1 // pred_fallthru
      _
    // Predicated region
    $region26: #{moco_forward.7} parent=1 // pred_check
      _
    $region27: #{moco_forward.7} parent=1 // pred_check_branch
      %77 = sbr.rel (0) target = $region29
    $region28: #{moco_forward.7} parent=1 // pred_region
      %79 = dma.done [#allocation3], 32
    $region29: #{moco_forward.7} parent=1 // pred_fallthru
      _
    %80 = vsyncpa [#allocation3], 1

</llo_original>
